<compile_context>
chip_gen: v5e
topology: v5e:2x2
jax: 0.10.0
libtpu: 0.0.40
codegen_flags: <defaults>
</compile_context>

<pallas_src>
import functools
import math

import jax
import jax.numpy as jnp
from jax.experimental import pallas as pl
from jax.experimental.pallas import tpu as pltpu


def _embed_gather_kernel(ids_ref, table_ref, out_ref, rows_vmem, sems, *, tb, scale):
    """Gather `tb` embedding rows via DMA and write one scaled (tb, D) block.

    ids_ref   : SMEM (N_pad,) int32   -- scalar-prefetched token ids
    table_ref : HBM  (V, D)           -- embedding table (memory_space=pl.ANY)
    out_ref   : VMEM (tb, D)          -- output block for this grid step
    rows_vmem : VMEM (tb, D) scratch  -- landing buffer for gathered rows
    sems      : DMA semaphores, shape (tb,)
    """
    base = pl.program_id(0) * tb

    # Issue all row fetches up front so the tb DMAs are in flight concurrently.
    copies = []
    for t in range(tb):  # static unroll: tb is a small fixed Python int
        tok = ids_ref[base + t]
        cp = pltpu.make_async_copy(
            table_ref.at[pl.ds(tok, 1), :],   # (1, D) row of the HBM table
            rows_vmem.at[pl.ds(t, 1), :],     # (1, D) slot of the VMEM scratch
            sems.at[t],
        )
        cp.start()
        copies.append(cp)

    # Wait on all of them (per-row semaphore, same descriptors reused).
    for cp in copies:
        cp.wait()

    # sqrt(dim) scale on the VPU; single dense (tb, D) store.
    out_ref[...] = (rows_vmem[...] * scale).astype(out_ref.dtype)


def transformer_embeddings_forward(tokens, table, *, tokens_per_block=None):
    """tokens: (B, S) int ids; table: (V, D). Returns (B, S, D) = table[tokens] * sqrt(D)."""
    B, S = tokens.shape
    V, D = table.shape
    scale = math.sqrt(D)

    N = B * S
    if tokens_per_block is None:
        # Fat enough to amortize grid-step overhead, small enough that the
        # statically-unrolled DMA issue loop stays cheap to compile.  VMEM cost
        # is ~3 * tb * D * itemsize (scratch + double-buffered output block):
        # tb=64 with D=4096 f32 is ~3 MiB — comfortably inside v7x's 64 MiB.
        tokens_per_block = 64
    tb = max(1, min(tokens_per_block, N))
    if tb >= 8:
        tb = (tb // 8) * 8   # keep the output block sublane-aligned
    n_pad = -(-N // tb) * tb

    ids = tokens.reshape(N).astype(jnp.int32)
    if n_pad != N:
        ids = jnp.pad(ids, (0, n_pad - N))   # pad with token 0; padded rows sliced off below

    out_flat = pl.pallas_call(
        functools.partial(_embed_gather_kernel, tb=tb, scale=scale),
        out_shape=jax.ShapeDtypeStruct((n_pad, D), table.dtype),
        grid_spec=pltpu.PrefetchScalarGridSpec(
            num_scalar_prefetch=1,                         # ids -> SMEM, drive the gather
            grid=(n_pad // tb,),
            in_specs=[pl.BlockSpec(memory_space=pl.ANY)],  # table stays in HBM, manual DMA
            out_specs=pl.BlockSpec((tb, D), lambda i, ids: (i, 0)),
            scratch_shapes=[
                pltpu.VMEM((tb, D), table.dtype),
                pltpu.SemaphoreType.DMA((tb,)),
            ],
        ),
        compiler_params=pltpu.CompilerParams(
            dimension_semantics=("parallel",),  # independent blocks; shards across v7x's 2 TCs
        ),
    )(ids, table)

    return out_flat[:N].reshape(B, S, D)


if __name__ == "__main__":
    # Module config (small, consistent with TransformerEmbeddings(vocab_size, dim)).
    vocab_size = 100
    dim = 32
    B, S = 2, 8

    key = jax.random.PRNGKey(0)
    k_tab, k_tok = jax.random.split(key)
    table = jax.random.normal(k_tab, (vocab_size, dim), dtype=jnp.float32)
    tokens = jax.random.randint(k_tok, (B, S), 0, vocab_size, dtype=jnp.int32)

    # tokens_per_block=8 -> 2 grid steps at this toy size (exercises the multi-block path).
    out = transformer_embeddings_forward(tokens, table, tokens_per_block=8)
    out = jax.block_until_ready(out)

    # Reference: nn.Embedding lookup followed by * sqrt(dim).
    ref = table[tokens] * math.sqrt(dim)
    assert out.shape == (B, S, dim)
    assert jnp.allclose(out, ref, rtol=1e-6, atol=1e-6), "mismatch vs reference"

    print("KERNEL_OK")
</pallas_src>

<mosaic_0001>
module attributes {stable_mosaic.version = 11 : i64} {
  func.func @_embed_gather_kernel(%arg0: i32, %arg1: memref<16xi32, #tpu.memory_space<smem>>, %arg2: memref<100x32xf32, #tpu.memory_space<any>>, %arg3: memref<8x32xf32, #tpu.memory_space<vmem>>, %arg4: memref<8x32xf32, #tpu.memory_space<vmem>>, %arg5: memref<8x!tpu.dma_semaphore, #tpu.memory_space<semaphore_mem>>) attributes {dimension_semantics = [#tpu.dimension_semantics<parallel>], iteration_bounds = array<i64: 2>, scalar_prefetch = 1 : i64, scratch_operands = 2 : i64, tpu.core_type = #tpu.core_type<tc>, window_params = [{}, {transform_indices = @transform_1, window_bounds = array<i64: 8, 32>}]} {
    %c8_i32 = arith.constant 8 : i32
    %0 = arith.muli %arg0, %c8_i32 : i32
    %c0_i32 = arith.constant 0 : i32
    %1 = arith.addi %0, %c0_i32 : i32
    %2 = arith.index_cast %1 : i32 to index
    %3 = memref.load %arg1[%2] : memref<16xi32, #tpu.memory_space<smem>>
    %c0_i32_0 = arith.constant 0 : i32
    %c0_i32_1 = arith.constant 0 : i32
    %4 = tpu.memref_slice %arg2[%3, %c0_i32_1] : memref<100x32xf32, #tpu.memory_space<any>> -> memref<1x32xf32, #tpu.memory_space<any>>
    %c0_i32_2 = arith.constant 0 : i32
    %c0_i32_3 = arith.constant 0 : i32
    %5 = tpu.memref_slice %arg4[%c0_i32_2, %c0_i32_3] : memref<8x32xf32, #tpu.memory_space<vmem>> -> memref<1x32xf32, #tpu.memory_space<vmem>>
    %6 = tpu.memref_slice %arg5[%c0_i32_0] : memref<8x!tpu.dma_semaphore, #tpu.memory_space<semaphore_mem>> -> memref<1x!tpu.dma_semaphore, #tpu.memory_space<semaphore_mem>>
    %7 = tpu.memref_squeeze %6 : memref<1x!tpu.dma_semaphore, #tpu.memory_space<semaphore_mem>> -> memref<!tpu.dma_semaphore, #tpu.memory_space<semaphore_mem>>
    tpu.enqueue_dma source(%4 : memref<1x32xf32, #tpu.memory_space<any>>) target(%5 : memref<1x32xf32, #tpu.memory_space<vmem>>) target_semaphore(%7 : memref<!tpu.dma_semaphore, #tpu.memory_space<semaphore_mem>>)
    %c1_i32 = arith.constant 1 : i32
    %8 = arith.addi %0, %c1_i32 : i32
    %9 = arith.index_cast %8 : i32 to index
    %10 = memref.load %arg1[%9] : memref<16xi32, #tpu.memory_space<smem>>
    %c1_i32_4 = arith.constant 1 : i32
    %c0_i32_5 = arith.constant 0 : i32
    %11 = tpu.memref_slice %arg2[%10, %c0_i32_5] : memref<100x32xf32, #tpu.memory_space<any>> -> memref<1x32xf32, #tpu.memory_space<any>>
    %c1_i32_6 = arith.constant 1 : i32
    %c0_i32_7 = arith.constant 0 : i32
    %12 = tpu.memref_slice %arg4[%c1_i32_6, %c0_i32_7] : memref<8x32xf32, #tpu.memory_space<vmem>> -> memref<1x32xf32, #tpu.memory_space<vmem>>
    %13 = tpu.memref_slice %arg5[%c1_i32_4] : memref<8x!tpu.dma_semaphore, #tpu.memory_space<semaphore_mem>> -> memref<1x!tpu.dma_semaphore, #tpu.memory_space<semaphore_mem>>
    %14 = tpu.memref_squeeze %13 : memref<1x!tpu.dma_semaphore, #tpu.memory_space<semaphore_mem>> -> memref<!tpu.dma_semaphore, #tpu.memory_space<semaphore_mem>>
    tpu.enqueue_dma source(%11 : memref<1x32xf32, #tpu.memory_space<any>>) target(%12 : memref<1x32xf32, #tpu.memory_space<vmem>>) target_semaphore(%14 : memref<!tpu.dma_semaphore, #tpu.memory_space<semaphore_mem>>)
    %c2_i32 = arith.constant 2 : i32
    %15 = arith.addi %0, %c2_i32 : i32
    %16 = arith.index_cast %15 : i32 to index
    %17 = memref.load %arg1[%16] : memref<16xi32, #tpu.memory_space<smem>>
    %c2_i32_8 = arith.constant 2 : i32
    %c0_i32_9 = arith.constant 0 : i32
    %18 = tpu.memref_slice %arg2[%17, %c0_i32_9] : memref<100x32xf32, #tpu.memory_space<any>> -> memref<1x32xf32, #tpu.memory_space<any>>
    %c2_i32_10 = arith.constant 2 : i32
    %c0_i32_11 = arith.constant 0 : i32
    %19 = tpu.memref_slice %arg4[%c2_i32_10, %c0_i32_11] : memref<8x32xf32, #tpu.memory_space<vmem>> -> memref<1x32xf32, #tpu.memory_space<vmem>>
    %20 = tpu.memref_slice %arg5[%c2_i32_8] : memref<8x!tpu.dma_semaphore, #tpu.memory_space<semaphore_mem>> -> memref<1x!tpu.dma_semaphore, #tpu.memory_space<semaphore_mem>>
    %21 = tpu.memref_squeeze %20 : memref<1x!tpu.dma_semaphore, #tpu.memory_space<semaphore_mem>> -> memref<!tpu.dma_semaphore, #tpu.memory_space<semaphore_mem>>
    tpu.enqueue_dma source(%18 : memref<1x32xf32, #tpu.memory_space<any>>) target(%19 : memref<1x32xf32, #tpu.memory_space<vmem>>) target_semaphore(%21 : memref<!tpu.dma_semaphore, #tpu.memory_space<semaphore_mem>>)
    %c3_i32 = arith.constant 3 : i32
    %22 = arith.addi %0, %c3_i32 : i32
    %23 = arith.index_cast %22 : i32 to index
    %24 = memref.load %arg1[%23] : memref<16xi32, #tpu.memory_space<smem>>
    %c3_i32_12 = arith.constant 3 : i32
    %c0_i32_13 = arith.constant 0 : i32
    %25 = tpu.memref_slice %arg2[%24, %c0_i32_13] : memref<100x32xf32, #tpu.memory_space<any>> -> memref<1x32xf32, #tpu.memory_space<any>>
    %c3_i32_14 = arith.constant 3 : i32
    %c0_i32_15 = arith.constant 0 : i32
    %26 = tpu.memref_slice %arg4[%c3_i32_14, %c0_i32_15] : memref<8x32xf32, #tpu.memory_space<vmem>> -> memref<1x32xf32, #tpu.memory_space<vmem>>
    %27 = tpu.memref_slice %arg5[%c3_i32_12] : memref<8x!tpu.dma_semaphore, #tpu.memory_space<semaphore_mem>> -> memref<1x!tpu.dma_semaphore, #tpu.memory_space<semaphore_mem>>
    %28 = tpu.memref_squeeze %27 : memref<1x!tpu.dma_semaphore, #tpu.memory_space<semaphore_mem>> -> memref<!tpu.dma_semaphore, #tpu.memory_space<semaphore_mem>>
    tpu.enqueue_dma source(%25 : memref<1x32xf32, #tpu.memory_space<any>>) target(%26 : memref<1x32xf32, #tpu.memory_space<vmem>>) target_semaphore(%28 : memref<!tpu.dma_semaphore, #tpu.memory_space<semaphore_mem>>)
    %c4_i32 = arith.constant 4 : i32
    %29 = arith.addi %0, %c4_i32 : i32
    %30 = arith.index_cast %29 : i32 to index
    %31 = memref.load %arg1[%30] : memref<16xi32, #tpu.memory_space<smem>>
    %c4_i32_16 = arith.constant 4 : i32
    %c0_i32_17 = arith.constant 0 : i32
    %32 = tpu.memref_slice %arg2[%31, %c0_i32_17] : memref<100x32xf32, #tpu.memory_space<any>> -> memref<1x32xf32, #tpu.memory_space<any>>
    %c4_i32_18 = arith.constant 4 : i32
    %c0_i32_19 = arith.constant 0 : i32
    %33 = tpu.memref_slice %arg4[%c4_i32_18, %c0_i32_19] : memref<8x32xf32, #tpu.memory_space<vmem>> -> memref<1x32xf32, #tpu.memory_space<vmem>>
    %34 = tpu.memref_slice %arg5[%c4_i32_16] : memref<8x!tpu.dma_semaphore, #tpu.memory_space<semaphore_mem>> -> memref<1x!tpu.dma_semaphore, #tpu.memory_space<semaphore_mem>>
    %35 = tpu.memref_squeeze %34 : memref<1x!tpu.dma_semaphore, #tpu.memory_space<semaphore_mem>> -> memref<!tpu.dma_semaphore, #tpu.memory_space<semaphore_mem>>
    tpu.enqueue_dma source(%32 : memref<1x32xf32, #tpu.memory_space<any>>) target(%33 : memref<1x32xf32, #tpu.memory_space<vmem>>) target_semaphore(%35 : memref<!tpu.dma_semaphore, #tpu.memory_space<semaphore_mem>>)
    %c5_i32 = arith.constant 5 : i32
    %36 = arith.addi %0, %c5_i32 : i32
    %37 = arith.index_cast %36 : i32 to index
    %38 = memref.load %arg1[%37] : memref<16xi32, #tpu.memory_space<smem>>
    %c5_i32_20 = arith.constant 5 : i32
    %c0_i32_21 = arith.constant 0 : i32
    %39 = tpu.memref_slice %arg2[%38, %c0_i32_21] : memref<100x32xf32, #tpu.memory_space<any>> -> memref<1x32xf32, #tpu.memory_space<any>>
    %c5_i32_22 = arith.constant 5 : i32
    %c0_i32_23 = arith.constant 0 : i32
    %40 = tpu.memref_slice %arg4[%c5_i32_22, %c0_i32_23] : memref<8x32xf32, #tpu.memory_space<vmem>> -> memref<1x32xf32, #tpu.memory_space<vmem>>
    %41 = tpu.memref_slice %arg5[%c5_i32_20] : memref<8x!tpu.dma_semaphore, #tpu.memory_space<semaphore_mem>> -> memref<1x!tpu.dma_semaphore, #tpu.memory_space<semaphore_mem>>
    %42 = tpu.memref_squeeze %41 : memref<1x!tpu.dma_semaphore, #tpu.memory_space<semaphore_mem>> -> memref<!tpu.dma_semaphore, #tpu.memory_space<semaphore_mem>>
    tpu.enqueue_dma source(%39 : memref<1x32xf32, #tpu.memory_space<any>>) target(%40 : memref<1x32xf32, #tpu.memory_space<vmem>>) target_semaphore(%42 : memref<!tpu.dma_semaphore, #tpu.memory_space<semaphore_mem>>)
    %c6_i32 = arith.constant 6 : i32
    %43 = arith.addi %0, %c6_i32 : i32
    %44 = arith.index_cast %43 : i32 to index
    %45 = memref.load %arg1[%44] : memref<16xi32, #tpu.memory_space<smem>>
    %c6_i32_24 = arith.constant 6 : i32
    %c0_i32_25 = arith.constant 0 : i32
    %46 = tpu.memref_slice %arg2[%45, %c0_i32_25] : memref<100x32xf32, #tpu.memory_space<any>> -> memref<1x32xf32, #tpu.memory_space<any>>
    %c6_i32_26 = arith.constant 6 : i32
    %c0_i32_27 = arith.constant 0 : i32
    %47 = tpu.memref_slice %arg4[%c6_i32_26, %c0_i32_27] : memref<8x32xf32, #tpu.memory_space<vmem>> -> memref<1x32xf32, #tpu.memory_space<vmem>>
    %48 = tpu.memref_slice %arg5[%c6_i32_24] : memref<8x!tpu.dma_semaphore, #tpu.memory_space<semaphore_mem>> -> memref<1x!tpu.dma_semaphore, #tpu.memory_space<semaphore_mem>>
    %49 = tpu.memref_squeeze %48 : memref<1x!tpu.dma_semaphore, #tpu.memory_space<semaphore_mem>> -> memref<!tpu.dma_semaphore, #tpu.memory_space<semaphore_mem>>
    tpu.enqueue_dma source(%46 : memref<1x32xf32, #tpu.memory_space<any>>) target(%47 : memref<1x32xf32, #tpu.memory_space<vmem>>) target_semaphore(%49 : memref<!tpu.dma_semaphore, #tpu.memory_space<semaphore_mem>>)
    %c7_i32 = arith.constant 7 : i32
    %50 = arith.addi %0, %c7_i32 : i32
    %51 = arith.index_cast %50 : i32 to index
    %52 = memref.load %arg1[%51] : memref<16xi32, #tpu.memory_space<smem>>
    %c7_i32_28 = arith.constant 7 : i32
    %c0_i32_29 = arith.constant 0 : i32
    %53 = tpu.memref_slice %arg2[%52, %c0_i32_29] : memref<100x32xf32, #tpu.memory_space<any>> -> memref<1x32xf32, #tpu.memory_space<any>>
    %c7_i32_30 = arith.constant 7 : i32
    %c0_i32_31 = arith.constant 0 : i32
    %54 = tpu.memref_slice %arg4[%c7_i32_30, %c0_i32_31] : memref<8x32xf32, #tpu.memory_space<vmem>> -> memref<1x32xf32, #tpu.memory_space<vmem>>
    %55 = tpu.memref_slice %arg5[%c7_i32_28] : memref<8x!tpu.dma_semaphore, #tpu.memory_space<semaphore_mem>> -> memref<1x!tpu.dma_semaphore, #tpu.memory_space<semaphore_mem>>
    %56 = tpu.memref_squeeze %55 : memref<1x!tpu.dma_semaphore, #tpu.memory_space<semaphore_mem>> -> memref<!tpu.dma_semaphore, #tpu.memory_space<semaphore_mem>>
    tpu.enqueue_dma source(%53 : memref<1x32xf32, #tpu.memory_space<any>>) target(%54 : memref<1x32xf32, #tpu.memory_space<vmem>>) target_semaphore(%56 : memref<!tpu.dma_semaphore, #tpu.memory_space<semaphore_mem>>)
    %c0_i32_32 = arith.constant 0 : i32
    %c0_i32_33 = arith.constant 0 : i32
    %57 = tpu.memref_slice %arg2[%3, %c0_i32_33] : memref<100x32xf32, #tpu.memory_space<any>> -> memref<1x32xf32, #tpu.memory_space<any>>
    %c0_i32_34 = arith.constant 0 : i32
    %c0_i32_35 = arith.constant 0 : i32
    %58 = tpu.memref_slice %arg4[%c0_i32_34, %c0_i32_35] : memref<8x32xf32, #tpu.memory_space<vmem>> -> memref<1x32xf32, #tpu.memory_space<vmem>>
    %59 = tpu.memref_slice %arg5[%c0_i32_32] : memref<8x!tpu.dma_semaphore, #tpu.memory_space<semaphore_mem>> -> memref<1x!tpu.dma_semaphore, #tpu.memory_space<semaphore_mem>>
    %60 = tpu.memref_squeeze %59 : memref<1x!tpu.dma_semaphore, #tpu.memory_space<semaphore_mem>> -> memref<!tpu.dma_semaphore, #tpu.memory_space<semaphore_mem>>
    tpu.wait_dma2 semaphore(%60 : memref<!tpu.dma_semaphore, #tpu.memory_space<semaphore_mem>>) src(%57 : memref<1x32xf32, #tpu.memory_space<any>>) dst(%58 : memref<1x32xf32, #tpu.memory_space<vmem>>)
    %c1_i32_36 = arith.constant 1 : i32
    %c0_i32_37 = arith.constant 0 : i32
    %61 = tpu.memref_slice %arg2[%10, %c0_i32_37] : memref<100x32xf32, #tpu.memory_space<any>> -> memref<1x32xf32, #tpu.memory_space<any>>
    %c1_i32_38 = arith.constant 1 : i32
    %c0_i32_39 = arith.constant 0 : i32
    %62 = tpu.memref_slice %arg4[%c1_i32_38, %c0_i32_39] : memref<8x32xf32, #tpu.memory_space<vmem>> -> memref<1x32xf32, #tpu.memory_space<vmem>>
    %63 = tpu.memref_slice %arg5[%c1_i32_36] : memref<8x!tpu.dma_semaphore, #tpu.memory_space<semaphore_mem>> -> memref<1x!tpu.dma_semaphore, #tpu.memory_space<semaphore_mem>>
    %64 = tpu.memref_squeeze %63 : memref<1x!tpu.dma_semaphore, #tpu.memory_space<semaphore_mem>> -> memref<!tpu.dma_semaphore, #tpu.memory_space<semaphore_mem>>
    tpu.wait_dma2 semaphore(%64 : memref<!tpu.dma_semaphore, #tpu.memory_space<semaphore_mem>>) src(%61 : memref<1x32xf32, #tpu.memory_space<any>>) dst(%62 : memref<1x32xf32, #tpu.memory_space<vmem>>)
    %c2_i32_40 = arith.constant 2 : i32
    %c0_i32_41 = arith.constant 0 : i32
    %65 = tpu.memref_slice %arg2[%17, %c0_i32_41] : memref<100x32xf32, #tpu.memory_space<any>> -> memref<1x32xf32, #tpu.memory_space<any>>
    %c2_i32_42 = arith.constant 2 : i32
    %c0_i32_43 = arith.constant 0 : i32
    %66 = tpu.memref_slice %arg4[%c2_i32_42, %c0_i32_43] : memref<8x32xf32, #tpu.memory_space<vmem>> -> memref<1x32xf32, #tpu.memory_space<vmem>>
    %67 = tpu.memref_slice %arg5[%c2_i32_40] : memref<8x!tpu.dma_semaphore, #tpu.memory_space<semaphore_mem>> -> memref<1x!tpu.dma_semaphore, #tpu.memory_space<semaphore_mem>>
    %68 = tpu.memref_squeeze %67 : memref<1x!tpu.dma_semaphore, #tpu.memory_space<semaphore_mem>> -> memref<!tpu.dma_semaphore, #tpu.memory_space<semaphore_mem>>
    tpu.wait_dma2 semaphore(%68 : memref<!tpu.dma_semaphore, #tpu.memory_space<semaphore_mem>>) src(%65 : memref<1x32xf32, #tpu.memory_space<any>>) dst(%66 : memref<1x32xf32, #tpu.memory_space<vmem>>)
    %c3_i32_44 = arith.constant 3 : i32
    %c0_i32_45 = arith.constant 0 : i32
    %69 = tpu.memref_slice %arg2[%24, %c0_i32_45] : memref<100x32xf32, #tpu.memory_space<any>> -> memref<1x32xf32, #tpu.memory_space<any>>
    %c3_i32_46 = arith.constant 3 : i32
    %c0_i32_47 = arith.constant 0 : i32
    %70 = tpu.memref_slice %arg4[%c3_i32_46, %c0_i32_47] : memref<8x32xf32, #tpu.memory_space<vmem>> -> memref<1x32xf32, #tpu.memory_space<vmem>>
    %71 = tpu.memref_slice %arg5[%c3_i32_44] : memref<8x!tpu.dma_semaphore, #tpu.memory_space<semaphore_mem>> -> memref<1x!tpu.dma_semaphore, #tpu.memory_space<semaphore_mem>>
    %72 = tpu.memref_squeeze %71 : memref<1x!tpu.dma_semaphore, #tpu.memory_space<semaphore_mem>> -> memref<!tpu.dma_semaphore, #tpu.memory_space<semaphore_mem>>
    tpu.wait_dma2 semaphore(%72 : memref<!tpu.dma_semaphore, #tpu.memory_space<semaphore_mem>>) src(%69 : memref<1x32xf32, #tpu.memory_space<any>>) dst(%70 : memref<1x32xf32, #tpu.memory_space<vmem>>)
    %c4_i32_48 = arith.constant 4 : i32
    %c0_i32_49 = arith.constant 0 : i32
    %73 = tpu.memref_slice %arg2[%31, %c0_i32_49] : memref<100x32xf32, #tpu.memory_space<any>> -> memref<1x32xf32, #tpu.memory_space<any>>
    %c4_i32_50 = arith.constant 4 : i32
    %c0_i32_51 = arith.constant 0 : i32
    %74 = tpu.memref_slice %arg4[%c4_i32_50, %c0_i32_51] : memref<8x32xf32, #tpu.memory_space<vmem>> -> memref<1x32xf32, #tpu.memory_space<vmem>>
    %75 = tpu.memref_slice %arg5[%c4_i32_48] : memref<8x!tpu.dma_semaphore, #tpu.memory_space<semaphore_mem>> -> memref<1x!tpu.dma_semaphore, #tpu.memory_space<semaphore_mem>>
    %76 = tpu.memref_squeeze %75 : memref<1x!tpu.dma_semaphore, #tpu.memory_space<semaphore_mem>> -> memref<!tpu.dma_semaphore, #tpu.memory_space<semaphore_mem>>
    tpu.wait_dma2 semaphore(%76 : memref<!tpu.dma_semaphore, #tpu.memory_space<semaphore_mem>>) src(%73 : memref<1x32xf32, #tpu.memory_space<any>>) dst(%74 : memref<1x32xf32, #tpu.memory_space<vmem>>)
    %c5_i32_52 = arith.constant 5 : i32
    %c0_i32_53 = arith.constant 0 : i32
    %77 = tpu.memref_slice %arg2[%38, %c0_i32_53] : memref<100x32xf32, #tpu.memory_space<any>> -> memref<1x32xf32, #tpu.memory_space<any>>
    %c5_i32_54 = arith.constant 5 : i32
    %c0_i32_55 = arith.constant 0 : i32
    %78 = tpu.memref_slice %arg4[%c5_i32_54, %c0_i32_55] : memref<8x32xf32, #tpu.memory_space<vmem>> -> memref<1x32xf32, #tpu.memory_space<vmem>>
    %79 = tpu.memref_slice %arg5[%c5_i32_52] : memref<8x!tpu.dma_semaphore, #tpu.memory_space<semaphore_mem>> -> memref<1x!tpu.dma_semaphore, #tpu.memory_space<semaphore_mem>>
    %80 = tpu.memref_squeeze %79 : memref<1x!tpu.dma_semaphore, #tpu.memory_space<semaphore_mem>> -> memref<!tpu.dma_semaphore, #tpu.memory_space<semaphore_mem>>
    tpu.wait_dma2 semaphore(%80 : memref<!tpu.dma_semaphore, #tpu.memory_space<semaphore_mem>>) src(%77 : memref<1x32xf32, #tpu.memory_space<any>>) dst(%78 : memref<1x32xf32, #tpu.memory_space<vmem>>)
    %c6_i32_56 = arith.constant 6 : i32
    %c0_i32_57 = arith.constant 0 : i32
    %81 = tpu.memref_slice %arg2[%45, %c0_i32_57] : memref<100x32xf32, #tpu.memory_space<any>> -> memref<1x32xf32, #tpu.memory_space<any>>
    %c6_i32_58 = arith.constant 6 : i32
    %c0_i32_59 = arith.constant 0 : i32
    %82 = tpu.memref_slice %arg4[%c6_i32_58, %c0_i32_59] : memref<8x32xf32, #tpu.memory_space<vmem>> -> memref<1x32xf32, #tpu.memory_space<vmem>>
    %83 = tpu.memref_slice %arg5[%c6_i32_56] : memref<8x!tpu.dma_semaphore, #tpu.memory_space<semaphore_mem>> -> memref<1x!tpu.dma_semaphore, #tpu.memory_space<semaphore_mem>>
    %84 = tpu.memref_squeeze %83 : memref<1x!tpu.dma_semaphore, #tpu.memory_space<semaphore_mem>> -> memref<!tpu.dma_semaphore, #tpu.memory_space<semaphore_mem>>
    tpu.wait_dma2 semaphore(%84 : memref<!tpu.dma_semaphore, #tpu.memory_space<semaphore_mem>>) src(%81 : memref<1x32xf32, #tpu.memory_space<any>>) dst(%82 : memref<1x32xf32, #tpu.memory_space<vmem>>)
    %c7_i32_60 = arith.constant 7 : i32
    %c0_i32_61 = arith.constant 0 : i32
    %85 = tpu.memref_slice %arg2[%52, %c0_i32_61] : memref<100x32xf32, #tpu.memory_space<any>> -> memref<1x32xf32, #tpu.memory_space<any>>
    %c7_i32_62 = arith.constant 7 : i32
    %c0_i32_63 = arith.constant 0 : i32
    %86 = tpu.memref_slice %arg4[%c7_i32_62, %c0_i32_63] : memref<8x32xf32, #tpu.memory_space<vmem>> -> memref<1x32xf32, #tpu.memory_space<vmem>>
    %87 = tpu.memref_slice %arg5[%c7_i32_60] : memref<8x!tpu.dma_semaphore, #tpu.memory_space<semaphore_mem>> -> memref<1x!tpu.dma_semaphore, #tpu.memory_space<semaphore_mem>>
    %88 = tpu.memref_squeeze %87 : memref<1x!tpu.dma_semaphore, #tpu.memory_space<semaphore_mem>> -> memref<!tpu.dma_semaphore, #tpu.memory_space<semaphore_mem>>
    tpu.wait_dma2 semaphore(%88 : memref<!tpu.dma_semaphore, #tpu.memory_space<semaphore_mem>>) src(%85 : memref<1x32xf32, #tpu.memory_space<any>>) dst(%86 : memref<1x32xf32, #tpu.memory_space<vmem>>)
    %c0 = arith.constant 0 : index
    %c0_64 = arith.constant 0 : index
    %89 = vector.load %arg4[%c0, %c0_64] : memref<8x32xf32, #tpu.memory_space<vmem>>, vector<8x32xf32>
    %cst = arith.constant 5.65685415 : f32
    %90 = vector.broadcast %cst : f32 to vector<8x32xf32>
    %91 = arith.mulf %89, %90 : vector<8x32xf32>
    %c0_65 = arith.constant 0 : index
    %c0_66 = arith.constant 0 : index
    %92 = vector.load %arg3[%c0_65, %c0_66] : memref<8x32xf32, #tpu.memory_space<vmem>>, vector<8x32xf32>
    tpu.vector_store %arg3[%c0_65, %c0_66], %91 {strides = array<i32>} : memref<8x32xf32, #tpu.memory_space<vmem>>, vector<8x32xf32>,
    return
  }
  func.func @transform_1(%arg0: i32, %arg1: memref<16xi32, #tpu.memory_space<smem>>) -> (i32, i32) {
    %c0_i32 = arith.constant 0 : i32
    %c0_i32_0 = arith.constant 0 : i32
    return %arg0, %c0_i32 : i32, i32
  }
}

</mosaic_0001>

<llo_original>
// kernel: tpu_custom_call.1
$region0: #{tpu_custom_call.1}
  #allocation0 [shape = 'u32[]', space=smem, size = 0x4, offset = 0x4, fixed_abs, tag = 'smem constant byte address 0x4 - core index']
  #allocation1 [shape = 'u32[72,128]{1,0:T(1,128)}', space=vmem, size = 0x9000, scoped, tag = 'internal scratch']
  #allocation2 [shape = 'f32[8,32]{1,0:T(8,128)}', space=vmem, size = 0x1000, scoped, tag = 'scratch operand']
  #allocation3 [shape = 's32[8]{0}', space=sflag, size = 0x20, scoped, tag = 'scratch operand']
  #allocation4 [shape = 's32[1]{0}', space=sflag, size = 0x4, scoped, tag = 'scoped memory for tpu_custom_call.1']
  #allocation5 [shape = 'u8[512]{0}', space=smem, size = 0x200, scoped, tag = 'prefetched SMEM operand 0']
  #allocation8 [shape = 's32[]', space=sflag, size = 0x4, offset = 0, fixed_abs, tag = 'sflag constant byte address 0x0 - dummy sync flag']
  #allocation9 [shape = 's32[]', space=sflag, size = 0x4, offset = 0, fixed_abs, tag = 'sflag constant byte address 0x0 - dummy sync flag']
  #allocation10 [shape = 's32[]', space=sflag, size = 0x4, offset = 0, fixed_abs, tag = 'sflag constant byte address 0x0 - dummy sync flag']
  #allocation11 [shape = 's32[]', space=sflag, size = 0x4, offset = 0, fixed_abs, tag = 'sflag constant byte address 0x0 - dummy sync flag']
  #allocation12 [shape = 's32[]', space=sflag, size = 0x4, offset = 0, fixed_abs, tag = 'sflag constant byte address 0x0 - dummy sync flag']
  #allocation13 [shape = 's32[]', space=sflag, size = 0x4, offset = 0, fixed_abs, tag = 'sflag constant byte address 0x0 - dummy sync flag']
  #allocation14 [shape = 's32[]', space=sflag, size = 0x4, offset = 0, fixed_abs, tag = 'sflag constant byte address 0x0 - dummy sync flag']
  #allocation15 [shape = 's32[]', space=sflag, size = 0x4, offset = 0, fixed_abs, tag = 'sflag constant byte address 0x0 - dummy sync flag']
  %s0 = inlined_call_operand.vmem [shape: s32[16], index: 0, kind: input, shape index: {}]
  %s1 = inlined_call_operand.vmem [shape: f32[100,32], index: 1, kind: input, shape index: {}]
  %s2 = inlined_call_operand.hbm [shape: f32[16,32], index: 2, kind: output, shape index: {}]
  %s3 = sld [smem:[#allocation0]]
  $region265: #{tpu_custom_call.1} parent=0
    _
  %s5 = ssub.s32 1, %s3
  %s6 = scalar_select 0, %s5, %s3
  %s8 = sshll.u32 %s0, 4
  %s9 = int_to_ptr.vmem [resolvable:$true] %s8
  %11 = dma.vmem_to_smem %s9, 16, [#allocation5], [#allocation4]
  %13 = dma.done [#allocation4], 16
  %14 = sfence
  $region1: #{tpu_custom_call.1} parent=0
    #allocation6 [shape = 'u8[8192]{0}', space=vmem, size = 0x2000, scoped, tag = 'output window, operand 0']
    #allocation7 [shape = 's32[2]{0}', space=sflag, size = 0x8, scoped, tag = 'scoped memory for tpu_custom_call.1']
    %15 = vsyncpa [#allocation7], 0
    %s16 = scalar_lea.sflag [#allocation7], 1
    %17 = vsyncpa %s16, 0
    loop: start=0, step=1, limit=3
    $region2: #{tpu_custom_call.1} parent=1 // loop_pre_header
      _
    $region3: #{tpu_custom_call.1} parent=1 // loop_header
      %s19 = sphi 0, %s23
      %p20 = scmp.ge.s32.totalorder %s19, 3
      %s28 = sphi 0, %s30
      %s31 = sphi 0, %s28
      %s41 = sphi 0, %s31
    $region4: #{tpu_custom_call.1} parent=1 // loop_header_branch
      %22 = sbr.rel (%p20) target = $region8
    $region5: #{tpu_custom_call.1} parent=1 // loop_body
      %s24 = ssub.s32 %s19, 1
      %s25 = sadd.s32 %s19, 1
      %s26 = ssub.s32 %s19, %s25
      %p27 = scmp.eq.s32.totalorder %s26, 0
      %s29 = sadd.s32 %s28, 1
      %s30 = scalar_select %p27, %s28, %s29
      %p32 = pneg %p27
      %p33 = scmp.eq.s32.totalorder %s19, 1
      %p34 = por %p32, %p33
      %p35 = scmp.ne.s32.totalorder %s28, %s31
      %p36 = scmp.eq.s32.totalorder %s19, 0
      %p37 = por %p35, %p36
      %p38 = scmp.ne.s32.totalorder %s28, %s31
      %p39 = scmp.eq.s32.totalorder %s24, 1
      %p40 = por %p38, %p39
      %p42 = scmp.ne.s32.totalorder %s31, %s41
      %p43 = scmp.eq.s32.totalorder %s24, 0
      %p44 = por %p42, %p43
      %p45 = scmp.lt.s32.totalorder %s19, 2
      // Predicated region
      $region9: #{tpu_custom_call.1} parent=5 // pred_check
        %p46 = pneg %p45
      $region10: #{tpu_custom_call.1} parent=5 // pred_check_branch
        %48 = sbr.rel (%p46) target = $region12
      $region11: #{tpu_custom_call.1} parent=5 // pred_region
        %p49 = pneg %p37
        %p50 = pneg %p34
        %s51 = sand.u32 %s28, 1
        %s52 = scalar_lea.sflag [#allocation7], %s51
        %s53 = sand.u32 %s28, 1
        %s54 = smul.addr %s53, 8
        %s55 = scalar_lea.vmem [#allocation6], %s54
        %s56 = smul.u32 %s19, 8
        %s57 = sld [smem:[#allocation5 + %s56]]
        %s58 = scalar_lea.vmem %s1, %s57
        // Predicated region
        $region13: #{tpu_custom_call.1} parent=11 // pred_check
          _
        $region14: #{tpu_custom_call.1} parent=11 // pred_check_branch
          %60 = sbr.rel target = $region16
        $region15: #{tpu_custom_call.1} parent=11 // pred_region
          // Predicated region
          $region28: #{tpu_custom_call.1} parent=15 // pred_check
            _
          $region29: #{tpu_custom_call.1} parent=15 // pred_check_branch
            %76 = sbr.rel (0) target = $region31
          $region30: #{tpu_custom_call.1} parent=15 // pred_region
            %s78 = ssub.s32 2, 1
            loop: start=0, step=1, limit=1
            $region32: #{tpu_custom_call.1} parent=30 // loop_pre_header
              _
            $region33: #{tpu_custom_call.1} parent=30 // loop_header
              %s80 = sphi 0, %s84
              %p81 = scmp.ge.s32.totalorder %s80, 1
              %s85 = sphi %s58, %s58
              %s86 = sphi [#allocation2], [#allocation2]
            $region34: #{tpu_custom_call.1} parent=30 // loop_header_branch
              %83 = sbr.rel (%p81) target = $region38
            $region35: #{tpu_custom_call.1} parent=30 // loop_body
              %v87 = vld [vmem:[%s85] sm:%s78]
              %88 = vst [vmem:[%s86] sm:%s78] %v87
            $region36: #{tpu_custom_call.1} parent=30 // loop_footer
              %s84 = sadd.s32 1, %s80
            $region37: #{tpu_custom_call.1} parent=30 // loop_footer_branch
              %79 = sbr.rel target = $region33
            $region38: #{tpu_custom_call.1} parent=30 // loop_exit
              _
          $region31: #{tpu_custom_call.1} parent=15 // pred_fallthru
            _
        $region16: #{tpu_custom_call.1} parent=11 // pred_fallthru
          _
        // Predicated region
        $region17: #{tpu_custom_call.1} parent=11 // pred_check
          _
        $region18: #{tpu_custom_call.1} parent=11 // pred_check_branch
          %62 = sbr.rel (0) target = $region20
        $region19: #{tpu_custom_call.1} parent=11 // pred_region
          %s64 = ssub.s32 2, 1
          loop: start=0, step=1, limit=1
          $region21: #{tpu_custom_call.1} parent=19 // loop_pre_header
            _
          $region22: #{tpu_custom_call.1} parent=19 // loop_header
            %s66 = sphi 0, %s70
            %p67 = scmp.ge.s32.totalorder %s66, 1
            %s71 = sphi %s58, %s58
            %s72 = sphi [#allocation2], [#allocation2]
          $region23: #{tpu_custom_call.1} parent=19 // loop_header_branch
            %69 = sbr.rel (%p67) target = $region27
          $region24: #{tpu_custom_call.1} parent=19 // loop_body
            %v73 = vld [vmem:[%s71] sm:%s64]
            %74 = vst [vmem:[%s72] sm:%s64] %v73
          $region25: #{tpu_custom_call.1} parent=19 // loop_footer
            %s70 = sadd.s32 1, %s66
          $region26: #{tpu_custom_call.1} parent=19 // loop_footer_branch
            %65 = sbr.rel target = $region22
          $region27: #{tpu_custom_call.1} parent=19 // loop_exit
            _
        $region20: #{tpu_custom_call.1} parent=11 // pred_fallthru
          _
        // Predicated region
        $region39: #{tpu_custom_call.1} parent=11 // pred_check
          _
        $region40: #{tpu_custom_call.1} parent=11 // pred_check_branch
          %91 = sbr.rel (0) target = $region42
        $region41: #{tpu_custom_call.1} parent=11 // pred_region
          %92 = vsyncadd [#allocation3], 16
        $region42: #{tpu_custom_call.1} parent=11 // pred_fallthru
          _
        %s93 = sadd.s32 %s56, 1
        %s94 = sld [smem:[#allocation5 + %s93]]
        %s95 = scalar_lea.vmem %s1, %s94
        %s96 = scalar_lea.vmem [#allocation2], 1
        %s97 = scalar_lea.sflag [#allocation3], 1
        // Predicated region
        $region43: #{tpu_custom_call.1} parent=11 // pred_check
          _
        $region44: #{tpu_custom_call.1} parent=11 // pred_check_branch
          %99 = sbr.rel target = $region46
        $region45: #{tpu_custom_call.1} parent=11 // pred_region
          // Predicated region
          $region58: #{tpu_custom_call.1} parent=45 // pred_check
            _
          $region59: #{tpu_custom_call.1} parent=45 // pred_check_branch
            %115 = sbr.rel (0) target = $region61
          $region60: #{tpu_custom_call.1} parent=45 // pred_region
            %s117 = ssub.s32 2, 1
            loop: start=0, step=1, limit=1
            $region62: #{tpu_custom_call.1} parent=60 // loop_pre_header
              _
            $region63: #{tpu_custom_call.1} parent=60 // loop_header
              %s119 = sphi 0, %s123
              %p120 = scmp.ge.s32.totalorder %s119, 1
              %s124 = sphi %s95, %s95
              %s125 = sphi %s96, %s96
            $region64: #{tpu_custom_call.1} parent=60 // loop_header_branch
              %122 = sbr.rel (%p120) target = $region68
            $region65: #{tpu_custom_call.1} parent=60 // loop_body
              %v126 = vld [vmem:[%s124] sm:%s117]
              %127 = vst [vmem:[%s125] sm:%s117] %v126
            $region66: #{tpu_custom_call.1} parent=60 // loop_footer
              %s123 = sadd.s32 1, %s119
            $region67: #{tpu_custom_call.1} parent=60 // loop_footer_branch
              %118 = sbr.rel target = $region63
            $region68: #{tpu_custom_call.1} parent=60 // loop_exit
              _
          $region61: #{tpu_custom_call.1} parent=45 // pred_fallthru
            _
        $region46: #{tpu_custom_call.1} parent=11 // pred_fallthru
          _
        // Predicated region
        $region47: #{tpu_custom_call.1} parent=11 // pred_check
          _
        $region48: #{tpu_custom_call.1} parent=11 // pred_check_branch
          %101 = sbr.rel (0) target = $region50
        $region49: #{tpu_custom_call.1} parent=11 // pred_region
          %s103 = ssub.s32 2, 1
          loop: start=0, step=1, limit=1
          $region51: #{tpu_custom_call.1} parent=49 // loop_pre_header
            _
          $region52: #{tpu_custom_call.1} parent=49 // loop_header
            %s105 = sphi 0, %s109
            %p106 = scmp.ge.s32.totalorder %s105, 1
            %s110 = sphi %s95, %s95
            %s111 = sphi %s96, %s96
          $region53: #{tpu_custom_call.1} parent=49 // loop_header_branch
            %108 = sbr.rel (%p106) target = $region57
          $region54: #{tpu_custom_call.1} parent=49 // loop_body
            %v112 = vld [vmem:[%s110] sm:%s103]
            %113 = vst [vmem:[%s111] sm:%s103] %v112
          $region55: #{tpu_custom_call.1} parent=49 // loop_footer
            %s109 = sadd.s32 1, %s105
          $region56: #{tpu_custom_call.1} parent=49 // loop_footer_branch
            %104 = sbr.rel target = $region52
          $region57: #{tpu_custom_call.1} parent=49 // loop_exit
            _
        $region50: #{tpu_custom_call.1} parent=11 // pred_fallthru
          _
        // Predicated region
        $region69: #{tpu_custom_call.1} parent=11 // pred_check
          _
        $region70: #{tpu_custom_call.1} parent=11 // pred_check_branch
          %130 = sbr.rel (0) target = $region72
        $region71: #{tpu_custom_call.1} parent=11 // pred_region
          %131 = vsyncadd %s97, 16
        $region72: #{tpu_custom_call.1} parent=11 // pred_fallthru
          _
        %s132 = sadd.s32 %s56, 2
        %s133 = sld [smem:[#allocation5 + %s132]]
        %s134 = scalar_lea.vmem %s1, %s133
        %s135 = scalar_lea.vmem [#allocation2], 2
        %s136 = scalar_lea.sflag [#allocation3], 2
        // Predicated region
        $region73: #{tpu_custom_call.1} parent=11 // pred_check
          _
        $region74: #{tpu_custom_call.1} parent=11 // pred_check_branch
          %138 = sbr.rel target = $region76
        $region75: #{tpu_custom_call.1} parent=11 // pred_region
          // Predicated region
          $region88: #{tpu_custom_call.1} parent=75 // pred_check
            _
          $region89: #{tpu_custom_call.1} parent=75 // pred_check_branch
            %154 = sbr.rel (0) target = $region91
          $region90: #{tpu_custom_call.1} parent=75 // pred_region
            %s156 = ssub.s32 2, 1
            loop: start=0, step=1, limit=1
            $region92: #{tpu_custom_call.1} parent=90 // loop_pre_header
              _
            $region93: #{tpu_custom_call.1} parent=90 // loop_header
              %s158 = sphi 0, %s162
              %p159 = scmp.ge.s32.totalorder %s158, 1
              %s163 = sphi %s134, %s134
              %s164 = sphi %s135, %s135
            $region94: #{tpu_custom_call.1} parent=90 // loop_header_branch
              %161 = sbr.rel (%p159) target = $region98
            $region95: #{tpu_custom_call.1} parent=90 // loop_body
              %v165 = vld [vmem:[%s163] sm:%s156]
              %166 = vst [vmem:[%s164] sm:%s156] %v165
            $region96: #{tpu_custom_call.1} parent=90 // loop_footer
              %s162 = sadd.s32 1, %s158
            $region97: #{tpu_custom_call.1} parent=90 // loop_footer_branch
              %157 = sbr.rel target = $region93
            $region98: #{tpu_custom_call.1} parent=90 // loop_exit
              _
          $region91: #{tpu_custom_call.1} parent=75 // pred_fallthru
            _
        $region76: #{tpu_custom_call.1} parent=11 // pred_fallthru
          _
        // Predicated region
        $region77: #{tpu_custom_call.1} parent=11 // pred_check
          _
        $region78: #{tpu_custom_call.1} parent=11 // pred_check_branch
          %140 = sbr.rel (0) target = $region80
        $region79: #{tpu_custom_call.1} parent=11 // pred_region
          %s142 = ssub.s32 2, 1
          loop: start=0, step=1, limit=1
          $region81: #{tpu_custom_call.1} parent=79 // loop_pre_header
            _
          $region82: #{tpu_custom_call.1} parent=79 // loop_header
            %s144 = sphi 0, %s148
            %p145 = scmp.ge.s32.totalorder %s144, 1
            %s149 = sphi %s134, %s134
            %s150 = sphi %s135, %s135
          $region83: #{tpu_custom_call.1} parent=79 // loop_header_branch
            %147 = sbr.rel (%p145) target = $region87
          $region84: #{tpu_custom_call.1} parent=79 // loop_body
            %v151 = vld [vmem:[%s149] sm:%s142]
            %152 = vst [vmem:[%s150] sm:%s142] %v151
          $region85: #{tpu_custom_call.1} parent=79 // loop_footer
            %s148 = sadd.s32 1, %s144
          $region86: #{tpu_custom_call.1} parent=79 // loop_footer_branch
            %143 = sbr.rel target = $region82
          $region87: #{tpu_custom_call.1} parent=79 // loop_exit
            _
        $region80: #{tpu_custom_call.1} parent=11 // pred_fallthru
          _
        // Predicated region
        $region99: #{tpu_custom_call.1} parent=11 // pred_check
          _
        $region100: #{tpu_custom_call.1} parent=11 // pred_check_branch
          %169 = sbr.rel (0) target = $region102
        $region101: #{tpu_custom_call.1} parent=11 // pred_region
          %170 = vsyncadd %s136, 16
        $region102: #{tpu_custom_call.1} parent=11 // pred_fallthru
          _
        %s171 = sadd.s32 %s56, 3
        %s172 = sld [smem:[#allocation5 + %s171]]
        %s173 = scalar_lea.vmem %s1, %s172
        %s174 = scalar_lea.vmem [#allocation2], 3
        %s175 = scalar_lea.sflag [#allocation3], 3
        // Predicated region
        $region103: #{tpu_custom_call.1} parent=11 // pred_check
          _
        $region104: #{tpu_custom_call.1} parent=11 // pred_check_branch
          %177 = sbr.rel target = $region106
        $region105: #{tpu_custom_call.1} parent=11 // pred_region
          // Predicated region
          $region118: #{tpu_custom_call.1} parent=105 // pred_check
            _
          $region119: #{tpu_custom_call.1} parent=105 // pred_check_branch
            %193 = sbr.rel (0) target = $region121
          $region120: #{tpu_custom_call.1} parent=105 // pred_region
            %s195 = ssub.s32 2, 1
            loop: start=0, step=1, limit=1
            $region122: #{tpu_custom_call.1} parent=120 // loop_pre_header
              _
            $region123: #{tpu_custom_call.1} parent=120 // loop_header
              %s197 = sphi 0, %s201
              %p198 = scmp.ge.s32.totalorder %s197, 1
              %s202 = sphi %s173, %s173
              %s203 = sphi %s174, %s174
            $region124: #{tpu_custom_call.1} parent=120 // loop_header_branch
              %200 = sbr.rel (%p198) target = $region128
            $region125: #{tpu_custom_call.1} parent=120 // loop_body
              %v204 = vld [vmem:[%s202] sm:%s195]
              %205 = vst [vmem:[%s203] sm:%s195] %v204
            $region126: #{tpu_custom_call.1} parent=120 // loop_footer
              %s201 = sadd.s32 1, %s197
            $region127: #{tpu_custom_call.1} parent=120 // loop_footer_branch
              %196 = sbr.rel target = $region123
            $region128: #{tpu_custom_call.1} parent=120 // loop_exit
              _
          $region121: #{tpu_custom_call.1} parent=105 // pred_fallthru
            _
        $region106: #{tpu_custom_call.1} parent=11 // pred_fallthru
          _
        // Predicated region
        $region107: #{tpu_custom_call.1} parent=11 // pred_check
          _
        $region108: #{tpu_custom_call.1} parent=11 // pred_check_branch
          %179 = sbr.rel (0) target = $region110
        $region109: #{tpu_custom_call.1} parent=11 // pred_region
          %s181 = ssub.s32 2, 1
          loop: start=0, step=1, limit=1
          $region111: #{tpu_custom_call.1} parent=109 // loop_pre_header
            _
          $region112: #{tpu_custom_call.1} parent=109 // loop_header
            %s183 = sphi 0, %s187
            %p184 = scmp.ge.s32.totalorder %s183, 1
            %s188 = sphi %s173, %s173
            %s189 = sphi %s174, %s174
          $region113: #{tpu_custom_call.1} parent=109 // loop_header_branch
            %186 = sbr.rel (%p184) target = $region117
          $region114: #{tpu_custom_call.1} parent=109 // loop_body
            %v190 = vld [vmem:[%s188] sm:%s181]
            %191 = vst [vmem:[%s189] sm:%s181] %v190
          $region115: #{tpu_custom_call.1} parent=109 // loop_footer
            %s187 = sadd.s32 1, %s183
          $region116: #{tpu_custom_call.1} parent=109 // loop_footer_branch
            %182 = sbr.rel target = $region112
          $region117: #{tpu_custom_call.1} parent=109 // loop_exit
            _
        $region110: #{tpu_custom_call.1} parent=11 // pred_fallthru
          _
        // Predicated region
        $region129: #{tpu_custom_call.1} parent=11 // pred_check
          _
        $region130: #{tpu_custom_call.1} parent=11 // pred_check_branch
          %208 = sbr.rel (0) target = $region132
        $region131: #{tpu_custom_call.1} parent=11 // pred_region
          %209 = vsyncadd %s175, 16
        $region132: #{tpu_custom_call.1} parent=11 // pred_fallthru
          _
        %s210 = sadd.s32 %s56, 4
        %s211 = sld [smem:[#allocation5 + %s210]]
        %s212 = scalar_lea.vmem %s1, %s211
        %s213 = scalar_lea.vmem [#allocation2], 4
        %s214 = scalar_lea.sflag [#allocation3], 4
        // Predicated region
        $region133: #{tpu_custom_call.1} parent=11 // pred_check
          _
        $region134: #{tpu_custom_call.1} parent=11 // pred_check_branch
          %216 = sbr.rel target = $region136
        $region135: #{tpu_custom_call.1} parent=11 // pred_region
          // Predicated region
          $region148: #{tpu_custom_call.1} parent=135 // pred_check
            _
          $region149: #{tpu_custom_call.1} parent=135 // pred_check_branch
            %232 = sbr.rel (0) target = $region151
          $region150: #{tpu_custom_call.1} parent=135 // pred_region
            %s234 = ssub.s32 2, 1
            loop: start=0, step=1, limit=1
            $region152: #{tpu_custom_call.1} parent=150 // loop_pre_header
              _
            $region153: #{tpu_custom_call.1} parent=150 // loop_header
              %s236 = sphi 0, %s240
              %p237 = scmp.ge.s32.totalorder %s236, 1
              %s241 = sphi %s212, %s212
              %s242 = sphi %s213, %s213
            $region154: #{tpu_custom_call.1} parent=150 // loop_header_branch
              %239 = sbr.rel (%p237) target = $region158
            $region155: #{tpu_custom_call.1} parent=150 // loop_body
              %v243 = vld [vmem:[%s241] sm:%s234]
              %244 = vst [vmem:[%s242] sm:%s234] %v243
            $region156: #{tpu_custom_call.1} parent=150 // loop_footer
              %s240 = sadd.s32 1, %s236
            $region157: #{tpu_custom_call.1} parent=150 // loop_footer_branch
              %235 = sbr.rel target = $region153
            $region158: #{tpu_custom_call.1} parent=150 // loop_exit
              _
          $region151: #{tpu_custom_call.1} parent=135 // pred_fallthru
            _
        $region136: #{tpu_custom_call.1} parent=11 // pred_fallthru
          _
        // Predicated region
        $region137: #{tpu_custom_call.1} parent=11 // pred_check
          _
        $region138: #{tpu_custom_call.1} parent=11 // pred_check_branch
          %218 = sbr.rel (0) target = $region140
        $region139: #{tpu_custom_call.1} parent=11 // pred_region
          %s220 = ssub.s32 2, 1
          loop: start=0, step=1, limit=1
          $region141: #{tpu_custom_call.1} parent=139 // loop_pre_header
            _
          $region142: #{tpu_custom_call.1} parent=139 // loop_header
            %s222 = sphi 0, %s226
            %p223 = scmp.ge.s32.totalorder %s222, 1
            %s227 = sphi %s212, %s212
            %s228 = sphi %s213, %s213
          $region143: #{tpu_custom_call.1} parent=139 // loop_header_branch
            %225 = sbr.rel (%p223) target = $region147
          $region144: #{tpu_custom_call.1} parent=139 // loop_body
            %v229 = vld [vmem:[%s227] sm:%s220]
            %230 = vst [vmem:[%s228] sm:%s220] %v229
          $region145: #{tpu_custom_call.1} parent=139 // loop_footer
            %s226 = sadd.s32 1, %s222
          $region146: #{tpu_custom_call.1} parent=139 // loop_footer_branch
            %221 = sbr.rel target = $region142
          $region147: #{tpu_custom_call.1} parent=139 // loop_exit
            _
        $region140: #{tpu_custom_call.1} parent=11 // pred_fallthru
          _
        // Predicated region
        $region159: #{tpu_custom_call.1} parent=11 // pred_check
          _
        $region160: #{tpu_custom_call.1} parent=11 // pred_check_branch
          %247 = sbr.rel (0) target = $region162
        $region161: #{tpu_custom_call.1} parent=11 // pred_region
          %248 = vsyncadd %s214, 16
        $region162: #{tpu_custom_call.1} parent=11 // pred_fallthru
          _
        %s249 = sadd.s32 %s56, 5
        %s250 = sld [smem:[#allocation5 + %s249]]
        %s251 = scalar_lea.vmem %s1, %s250
        %s252 = scalar_lea.vmem [#allocation2], 5
        %s253 = scalar_lea.sflag [#allocation3], 5
        // Predicated region
        $region163: #{tpu_custom_call.1} parent=11 // pred_check
          _
        $region164: #{tpu_custom_call.1} parent=11 // pred_check_branch
          %255 = sbr.rel target = $region166
        $region165: #{tpu_custom_call.1} parent=11 // pred_region
          // Predicated region
          $region178: #{tpu_custom_call.1} parent=165 // pred_check
            _
          $region179: #{tpu_custom_call.1} parent=165 // pred_check_branch
            %271 = sbr.rel (0) target = $region181
          $region180: #{tpu_custom_call.1} parent=165 // pred_region
            %s273 = ssub.s32 2, 1
            loop: start=0, step=1, limit=1
            $region182: #{tpu_custom_call.1} parent=180 // loop_pre_header
              _
            $region183: #{tpu_custom_call.1} parent=180 // loop_header
              %s275 = sphi 0, %s279
              %p276 = scmp.ge.s32.totalorder %s275, 1
              %s280 = sphi %s251, %s251
              %s281 = sphi %s252, %s252
            $region184: #{tpu_custom_call.1} parent=180 // loop_header_branch
              %278 = sbr.rel (%p276) target = $region188
            $region185: #{tpu_custom_call.1} parent=180 // loop_body
              %v282 = vld [vmem:[%s280] sm:%s273]
              %283 = vst [vmem:[%s281] sm:%s273] %v282
            $region186: #{tpu_custom_call.1} parent=180 // loop_footer
              %s279 = sadd.s32 1, %s275
            $region187: #{tpu_custom_call.1} parent=180 // loop_footer_branch
              %274 = sbr.rel target = $region183
            $region188: #{tpu_custom_call.1} parent=180 // loop_exit
              _
          $region181: #{tpu_custom_call.1} parent=165 // pred_fallthru
            _
        $region166: #{tpu_custom_call.1} parent=11 // pred_fallthru
          _
        // Predicated region
        $region167: #{tpu_custom_call.1} parent=11 // pred_check
          _
        $region168: #{tpu_custom_call.1} parent=11 // pred_check_branch
          %257 = sbr.rel (0) target = $region170
        $region169: #{tpu_custom_call.1} parent=11 // pred_region
          %s259 = ssub.s32 2, 1
          loop: start=0, step=1, limit=1
          $region171: #{tpu_custom_call.1} parent=169 // loop_pre_header
            _
          $region172: #{tpu_custom_call.1} parent=169 // loop_header
            %s261 = sphi 0, %s265
            %p262 = scmp.ge.s32.totalorder %s261, 1
            %s266 = sphi %s251, %s251
            %s267 = sphi %s252, %s252
          $region173: #{tpu_custom_call.1} parent=169 // loop_header_branch
            %264 = sbr.rel (%p262) target = $region177
          $region174: #{tpu_custom_call.1} parent=169 // loop_body
            %v268 = vld [vmem:[%s266] sm:%s259]
            %269 = vst [vmem:[%s267] sm:%s259] %v268
          $region175: #{tpu_custom_call.1} parent=169 // loop_footer
            %s265 = sadd.s32 1, %s261
          $region176: #{tpu_custom_call.1} parent=169 // loop_footer_branch
            %260 = sbr.rel target = $region172
          $region177: #{tpu_custom_call.1} parent=169 // loop_exit
            _
        $region170: #{tpu_custom_call.1} parent=11 // pred_fallthru
          _
        // Predicated region
        $region189: #{tpu_custom_call.1} parent=11 // pred_check
          _
        $region190: #{tpu_custom_call.1} parent=11 // pred_check_branch
          %286 = sbr.rel (0) target = $region192
        $region191: #{tpu_custom_call.1} parent=11 // pred_region
          %287 = vsyncadd %s253, 16
        $region192: #{tpu_custom_call.1} parent=11 // pred_fallthru
          _
        %s288 = sadd.s32 %s56, 6
        %s289 = sld [smem:[#allocation5 + %s288]]
        %s290 = scalar_lea.vmem %s1, %s289
        %s291 = scalar_lea.vmem [#allocation2], 6
        %s292 = scalar_lea.sflag [#allocation3], 6
        // Predicated region
        $region193: #{tpu_custom_call.1} parent=11 // pred_check
          _
        $region194: #{tpu_custom_call.1} parent=11 // pred_check_branch
          %294 = sbr.rel target = $region196
        $region195: #{tpu_custom_call.1} parent=11 // pred_region
          // Predicated region
          $region208: #{tpu_custom_call.1} parent=195 // pred_check
            _
          $region209: #{tpu_custom_call.1} parent=195 // pred_check_branch
            %310 = sbr.rel (0) target = $region211
          $region210: #{tpu_custom_call.1} parent=195 // pred_region
            %s312 = ssub.s32 2, 1
            loop: start=0, step=1, limit=1
            $region212: #{tpu_custom_call.1} parent=210 // loop_pre_header
              _
            $region213: #{tpu_custom_call.1} parent=210 // loop_header
              %s314 = sphi 0, %s318
              %p315 = scmp.ge.s32.totalorder %s314, 1
              %s319 = sphi %s290, %s290
              %s320 = sphi %s291, %s291
            $region214: #{tpu_custom_call.1} parent=210 // loop_header_branch
              %317 = sbr.rel (%p315) target = $region218
            $region215: #{tpu_custom_call.1} parent=210 // loop_body
              %v321 = vld [vmem:[%s319] sm:%s312]
              %322 = vst [vmem:[%s320] sm:%s312] %v321
            $region216: #{tpu_custom_call.1} parent=210 // loop_footer
              %s318 = sadd.s32 1, %s314
            $region217: #{tpu_custom_call.1} parent=210 // loop_footer_branch
              %313 = sbr.rel target = $region213
            $region218: #{tpu_custom_call.1} parent=210 // loop_exit
              _
          $region211: #{tpu_custom_call.1} parent=195 // pred_fallthru
            _
        $region196: #{tpu_custom_call.1} parent=11 // pred_fallthru
          _
        // Predicated region
        $region197: #{tpu_custom_call.1} parent=11 // pred_check
          _
        $region198: #{tpu_custom_call.1} parent=11 // pred_check_branch
          %296 = sbr.rel (0) target = $region200
        $region199: #{tpu_custom_call.1} parent=11 // pred_region
          %s298 = ssub.s32 2, 1
          loop: start=0, step=1, limit=1
          $region201: #{tpu_custom_call.1} parent=199 // loop_pre_header
            _
          $region202: #{tpu_custom_call.1} parent=199 // loop_header
            %s300 = sphi 0, %s304
            %p301 = scmp.ge.s32.totalorder %s300, 1
            %s305 = sphi %s290, %s290
            %s306 = sphi %s291, %s291
          $region203: #{tpu_custom_call.1} parent=199 // loop_header_branch
            %303 = sbr.rel (%p301) target = $region207
          $region204: #{tpu_custom_call.1} parent=199 // loop_body
            %v307 = vld [vmem:[%s305] sm:%s298]
            %308 = vst [vmem:[%s306] sm:%s298] %v307
          $region205: #{tpu_custom_call.1} parent=199 // loop_footer
            %s304 = sadd.s32 1, %s300
          $region206: #{tpu_custom_call.1} parent=199 // loop_footer_branch
            %299 = sbr.rel target = $region202
          $region207: #{tpu_custom_call.1} parent=199 // loop_exit
            _
        $region200: #{tpu_custom_call.1} parent=11 // pred_fallthru
          _
        // Predicated region
        $region219: #{tpu_custom_call.1} parent=11 // pred_check
          _
        $region220: #{tpu_custom_call.1} parent=11 // pred_check_branch
          %325 = sbr.rel (0) target = $region222
        $region221: #{tpu_custom_call.1} parent=11 // pred_region
          %326 = vsyncadd %s292, 16
        $region222: #{tpu_custom_call.1} parent=11 // pred_fallthru
          _
        %s327 = sadd.s32 %s56, 7
        %s328 = sld [smem:[#allocation5 + %s327]]
        %s329 = scalar_lea.vmem %s1, %s328
        %s330 = scalar_lea.vmem [#allocation2], 7
        %s331 = scalar_lea.sflag [#allocation3], 7
        // Predicated region
        $region223: #{tpu_custom_call.1} parent=11 // pred_check
          _
        $region224: #{tpu_custom_call.1} parent=11 // pred_check_branch
          %333 = sbr.rel target = $region226
        $region225: #{tpu_custom_call.1} parent=11 // pred_region
          // Predicated region
          $region238: #{tpu_custom_call.1} parent=225 // pred_check
            _
          $region239: #{tpu_custom_call.1} parent=225 // pred_check_branch
            %349 = sbr.rel (0) target = $region241
          $region240: #{tpu_custom_call.1} parent=225 // pred_region
            %s351 = ssub.s32 2, 1
            loop: start=0, step=1, limit=1
            $region242: #{tpu_custom_call.1} parent=240 // loop_pre_header
              _
            $region243: #{tpu_custom_call.1} parent=240 // loop_header
              %s353 = sphi 0, %s357
              %p354 = scmp.ge.s32.totalorder %s353, 1
              %s358 = sphi %s329, %s329
              %s359 = sphi %s330, %s330
            $region244: #{tpu_custom_call.1} parent=240 // loop_header_branch
              %356 = sbr.rel (%p354) target = $region248
            $region245: #{tpu_custom_call.1} parent=240 // loop_body
              %v360 = vld [vmem:[%s358] sm:%s351]
              %361 = vst [vmem:[%s359] sm:%s351] %v360
            $region246: #{tpu_custom_call.1} parent=240 // loop_footer
              %s357 = sadd.s32 1, %s353
            $region247: #{tpu_custom_call.1} parent=240 // loop_footer_branch
              %352 = sbr.rel target = $region243
            $region248: #{tpu_custom_call.1} parent=240 // loop_exit
              _
          $region241: #{tpu_custom_call.1} parent=225 // pred_fallthru
            _
        $region226: #{tpu_custom_call.1} parent=11 // pred_fallthru
          _
        // Predicated region
        $region227: #{tpu_custom_call.1} parent=11 // pred_check
          _
        $region228: #{tpu_custom_call.1} parent=11 // pred_check_branch
          %335 = sbr.rel (0) target = $region230
        $region229: #{tpu_custom_call.1} parent=11 // pred_region
          %s337 = ssub.s32 2, 1
          loop: start=0, step=1, limit=1
          $region231: #{tpu_custom_call.1} parent=229 // loop_pre_header
            _
          $region232: #{tpu_custom_call.1} parent=229 // loop_header
            %s339 = sphi 0, %s343
            %p340 = scmp.ge.s32.totalorder %s339, 1
            %s344 = sphi %s329, %s329
            %s345 = sphi %s330, %s330
          $region233: #{tpu_custom_call.1} parent=229 // loop_header_branch
            %342 = sbr.rel (%p340) target = $region237
          $region234: #{tpu_custom_call.1} parent=229 // loop_body
            %v346 = vld [vmem:[%s344] sm:%s337]
            %347 = vst [vmem:[%s345] sm:%s337] %v346
          $region235: #{tpu_custom_call.1} parent=229 // loop_footer
            %s343 = sadd.s32 1, %s339
          $region236: #{tpu_custom_call.1} parent=229 // loop_footer_branch
            %338 = sbr.rel target = $region232
          $region237: #{tpu_custom_call.1} parent=229 // loop_exit
            _
        $region230: #{tpu_custom_call.1} parent=11 // pred_fallthru
          _
        // Predicated region
        $region249: #{tpu_custom_call.1} parent=11 // pred_check
          _
        $region250: #{tpu_custom_call.1} parent=11 // pred_check_branch
          %364 = sbr.rel (0) target = $region252
        $region251: #{tpu_custom_call.1} parent=11 // pred_region
          %365 = vsyncadd %s331, 16
        $region252: #{tpu_custom_call.1} parent=11 // pred_fallthru
          _
        %s366 = smul.u32 1, 1
        %s367 = sshll.u32 %s366, 4
        %368 = dma.done [#allocation3], %s367
        %s369 = sshll.u32 %s366, 4
        %370 = dma.done %s97, %s369
        %s371 = sshll.u32 %s366, 4
        %372 = dma.done %s136, %s371
        %s373 = sshll.u32 %s366, 4
        %374 = dma.done %s175, %s373
        %s375 = sshll.u32 %s366, 4
        %376 = dma.done %s214, %s375
        %s377 = sshll.u32 %s366, 4
        %378 = dma.done %s253, %s377
        %s379 = sshll.u32 %s366, 4
        %380 = dma.done %s292, %s379
        %s381 = sshll.u32 %s366, 4
        %382 = dma.done %s331, %s381
        %v383 = vld [vmem:[#allocation2] sm:$0xff]
        %v384 = vmul.f32 %v383, 5.656854
        %vm385 = vcmask 261120
        %386 = vst.msk [vmem:[%s55] sm:$0xff] %vm385, %v384
        %s387 = sand.u32 %s28, 1
        %s388 = scalar_lea.sflag [#allocation7], %s387
        %s389 = sand.u32 %s28, 1
        %s390 = smul.addr %s389, 8
        %s391 = scalar_lea.vmem [#allocation6], %s390
        // Predicated region
        $region253: #{tpu_custom_call.1} parent=11 // pred_check
          %p392 = pneg %p34
        $region254: #{tpu_custom_call.1} parent=11 // pred_check_branch
          %394 = sbr.rel (%p392) target = $region256
        $region255: #{tpu_custom_call.1} parent=11 // pred_region
          %396 = vsyncadd %s388, 0
          %s397 = smul.addr %s19, 8
          %s398 = scalar_lea.hbm %s2, %s397
          %s400 = sshll.u32 %s391, 4
          %s401 = int_to_ptr.vmem [resolvable:$true] %s400
          %s402 = sshll.u32 %s398, 4
          %s403 = int_to_ptr.hbm [resolvable:$true] %s402
          %405 = dma.vmem_to_hbm [thread:$0]  %s401, 128, %s403, %s388
        $region256: #{tpu_custom_call.1} parent=11 // pred_fallthru
          _
      $region12: #{tpu_custom_call.1} parent=5 // pred_fallthru
        _
      %p406 = scmp.le.s32.totalorder 1, %s19
      // Predicated region
      $region257: #{tpu_custom_call.1} parent=5 // pred_check
        %p407 = pneg %p406
      $region258: #{tpu_custom_call.1} parent=5 // pred_check_branch
        %409 = sbr.rel (%p407) target = $region260
      $region259: #{tpu_custom_call.1} parent=5 // pred_region
        %s410 = ssub.s32 %s19, 1
        // Predicated region
        $region261: #{tpu_custom_call.1} parent=259 // pred_check
          %p411 = pneg %p40
        $region262: #{tpu_custom_call.1} parent=259 // pred_check_branch
          %413 = sbr.rel (%p411) target = $region264
        $region263: #{tpu_custom_call.1} parent=259 // pred_region
          %s414 = sand.u32 %s31, 1
          %s415 = scalar_lea.sflag [#allocation7], %s414
          %s416 = sand.u32 %s31, 1
          %s417 = smul.addr %s416, 8
          %s418 = scalar_lea.vmem [#allocation6], %s417
          %420 = dma.done %s415, 128
        $region264: #{tpu_custom_call.1} parent=259 // pred_fallthru
          _
      $region260: #{tpu_custom_call.1} parent=5 // pred_fallthru
        _
    $region6: #{tpu_custom_call.1} parent=1 // loop_footer
      %s23 = sadd.s32 1, %s19
    $region7: #{tpu_custom_call.1} parent=1 // loop_footer_branch
      %18 = sbr.rel target = $region3
    $region8: #{tpu_custom_call.1} parent=1 // loop_exit
      _
    %421 = vsyncpa [#allocation7], 1
    %s422 = scalar_lea.sflag [#allocation7], 1
    %423 = vsyncpa %s422, 1
  %424 = vsyncmov [#allocation3]
  %s425 = vpop.sfrf %424
  %p426 = scmp.eq.s32.totalorder %s425, 0
  %p427 = pneg %p426
  %429 = shalt.err (%p427)
  %s430 = scalar_lea.sflag [#allocation3], 1
  %431 = vsyncmov %s430
  %s432 = vpop.sfrf %431
  %p433 = scmp.eq.s32.totalorder %s432, 0
  %p434 = pneg %p433
  %436 = shalt.err (%p434)
  %s437 = scalar_lea.sflag [#allocation3], 2
  %438 = vsyncmov %s437
  %s439 = vpop.sfrf %438
  %p440 = scmp.eq.s32.totalorder %s439, 0
  %p441 = pneg %p440
  %443 = shalt.err (%p441)
  %s444 = scalar_lea.sflag [#allocation3], 3
  %445 = vsyncmov %s444
  %s446 = vpop.sfrf %445
  %p447 = scmp.eq.s32.totalorder %s446, 0
  %p448 = pneg %p447
  %450 = shalt.err (%p448)
  %s451 = scalar_lea.sflag [#allocation3], 4
  %452 = vsyncmov %s451
  %s453 = vpop.sfrf %452
  %p454 = scmp.eq.s32.totalorder %s453, 0
  %p455 = pneg %p454
  %457 = shalt.err (%p455)
  %s458 = scalar_lea.sflag [#allocation3], 5
  %459 = vsyncmov %s458
  %s460 = vpop.sfrf %459
  %p461 = scmp.eq.s32.totalorder %s460, 0
  %p462 = pneg %p461
  %464 = shalt.err (%p462)
  %s465 = scalar_lea.sflag [#allocation3], 6
  %466 = vsyncmov %s465
  %s467 = vpop.sfrf %466
  %p468 = scmp.eq.s32.totalorder %s467, 0
  %p469 = pneg %p468
  %471 = shalt.err (%p469)
  %s472 = scalar_lea.sflag [#allocation3], 7
  %473 = vsyncmov %s472
  %s474 = vpop.sfrf %473
  %p475 = scmp.eq.s32.totalorder %s474, 0
  %p476 = pneg %p475
  %478 = shalt.err (%p476)

</llo_original>
